<compile_context>
chip_gen: v6e
topology: v6e:2x2x1
jax: 0.10.0
libtpu: 0.0.40
codegen_flags: <defaults>
</compile_context>

<pallas_src>
import jax
import jax.numpy as jnp
from jax import lax
from jax.experimental import pallas as pl
from jax.experimental.pallas import tpu as pltpu

N, C, H, W = 2, 4, 16, 16      # batch, channels (in == out), spatial
KH = KW = 3
LANES = C * N * W              # 128 — full lane occupancy
EPS = 1e-5


# --------------------------------------------------------------------------- #
# Kernel
# --------------------------------------------------------------------------- #
def basic_block_kernel(x_ref, m1_ref, m2_ref, b1_ref, b2_ref, out_ref):
    """x_ref/out_ref : VMEM (H, 128) slabs, lane index = c*(N*W) + n*W + w
    m1_ref/m2_ref : VMEM (384, 128) stacked per-dy (channel-mix x width-shift)
                    matrices with the folded BN scale baked in
    b1_ref/b2_ref : VMEM (1, 128) folded BN bias rows (per output-channel lane block)
    """
    x = x_ref[...]                                          # (16, 128); reused as residual

    # Row masks for the zero-padded height shifts — built ONCE, reused by both convs.
    row = lax.broadcasted_iota(jnp.int32, (H, LANES), 0)
    top_row = row == 0
    bot_row = row == H - 1

    def conv_bn(slab, m_ref, b_ref):
        # Height shift via XLU sublane rotation + one select each (no concat copies).
        s_prev = jnp.where(top_row, 0.0, pltpu.roll(slab, 1, 0))      # row h -> in[h-1]
        s_next = jnp.where(bot_row, 0.0, pltpu.roll(slab, H - 1, 0))  # row h -> in[h+1]
        # Lane-axis concat is pure vreg placement; single K=384 MXU matmul.
        lhs = jnp.concatenate([s_prev, slab, s_next], axis=-1)        # (16, 384)
        acc = jnp.dot(lhs, m_ref[...], preferred_element_type=jnp.float32)
        return acc + b_ref[...]                                       # folded BN bias

    y = jnp.maximum(conv_bn(x, m1_ref, b1_ref), 0.0)                  # conv1+bn1+relu
    out_ref[...] = jnp.maximum(conv_bn(y, m2_ref, b2_ref) + x, 0.0)   # conv2+bn2+res+relu


# --------------------------------------------------------------------------- #
# One-time (parameter-load-time) weight preprocessing
# --------------------------------------------------------------------------- #
def _fold_bn(bn):
    g, b, m, v = bn
    s = g / jnp.sqrt(v + EPS)
    return s.astype(jnp.float32), (b - m * s).astype(jnp.float32)


def _conv_mix_matrix(w, scale):
    """Build a (3*128, 128) matrix M = [M0; M1; M2] such that for slabs with lane
    index L = c*(N*W) + n*W + w:
        out_slab = [S_prev | S_id | S_next] @ M
    where S_dy is the input slab shifted in height by (dy-1) with zero fill.
    M_dy[(c1,n1,w1), (c2,n2,w2)] = w[c2,c1,dy,w1-w2+1]*scale[c2] if n1==n2 and
    |w1-w2| <= 1, else 0 (this also encodes the zero padding along width)."""
    wf = (w * scale[:, None, None, None]).astype(jnp.float32)   # (C_out, C_in, 3, 3)
    lane = jnp.arange(LANES)
    c_of, n_of, w_of = lane // (N * W), (lane // W) % N, lane % W
    c1, n1, w1 = c_of[:, None], n_of[:, None], w_of[:, None]    # input lane  (rows)
    c2, n2, w2 = c_of[None, :], n_of[None, :], w_of[None, :]    # output lane (cols)
    dx = w1 - w2 + 1                                            # kernel column index
    valid = (n1 == n2) & (dx >= 0) & (dx <= 2)
    dxc = jnp.clip(dx, 0, 2)
    blocks = [jnp.where(valid, wf[c2, c1, dy, dxc], 0.0) for dy in range(KH)]
    return jnp.concatenate(blocks, axis=0)                      # (384, 128)


def prepare_block_params(w1, w2, bn1, bn2):
    """Weights-only preprocessing. Call ONCE when parameters are loaded/updated;
    the per-forward path only consumes the returned arrays."""
    assert w1.shape == (C, C, KH, KW) and w2.shape == (C, C, KH, KW), \
        "kernel is specialized to C_in == C_out == 4, 3x3, stride 1, identity shortcut"
    s1, b1 = _fold_bn(bn1)
    s2, b2 = _fold_bn(bn2)
    m1 = _conv_mix_matrix(w1, s1)                   # (384, 128), BN1 scale folded
    m2 = _conv_mix_matrix(w2, s2)                   # (384, 128), BN2 scale folded
    b1_row = jnp.repeat(b1, N * W)[None, :]         # (1, 128)
    b2_row = jnp.repeat(b2, N * W)[None, :]         # (1, 128)
    return m1, m2, b1_row, b2_row


# --------------------------------------------------------------------------- #
# Forward pass
# --------------------------------------------------------------------------- #
@jax.jit
def basic_block_slab(x_slab, m1, m2, b1_row, b2_row):
    """Chain-friendly forward: takes/returns the (H, 128) slab layout so stacked
    BasicBlocks never pay the NCHW relayout between blocks."""
    vmem = pl.BlockSpec(memory_space=pltpu.MemorySpace.VMEM)
    return pl.pallas_call(
        basic_block_kernel,
        out_shape=jax.ShapeDtypeStruct((H, LANES), jnp.float32),
        in_specs=[vmem, vmem, vmem, vmem, vmem],
        out_specs=vmem,
    )(x_slab, m1, m2, b1_row, b2_row)


def nchw_to_slab(x_nchw):
    # (N, C, H, W) -> lane-dense slab (H, C*N*W): layout plumbing at network boundary.
    return jnp.transpose(x_nchw.astype(jnp.float32), (2, 1, 0, 3)).reshape(H, LANES)


def slab_to_nchw(slab):
    return jnp.transpose(slab.reshape(H, C, N, W), (2, 1, 0, 3))


def resnet_basic_block(x_nchw, block_params):
    """NCHW convenience wrapper (standalone use / testing). In a real network keep
    activations in slab layout across blocks and call basic_block_slab directly."""
    assert x_nchw.shape == (N, C, H, W), "kernel specialized to (2, 4, 16, 16)"
    out_slab = basic_block_slab(nchw_to_slab(x_nchw), *block_params)
    return slab_to_nchw(out_slab)


# --------------------------------------------------------------------------- #
# Pure-JAX reference (PyTorch forward, BN in inference mode)
# --------------------------------------------------------------------------- #
def reference_block(x, w1, w2, bn1, bn2):
    def conv(inp, w):
        return lax.conv_general_dilated(
            inp, w, window_strides=(1, 1), padding=((1, 1), (1, 1)),
            dimension_numbers=("NCHW", "OIHW", "NCHW"),
            precision=lax.Precision.HIGHEST)

    def bn(y, p):
        g, b, m, v = (a[None, :, None, None] for a in p)
        return (y - m) / jnp.sqrt(v + EPS) * g + b

    y = jax.nn.relu(bn(conv(x, w1), bn1))
    y = bn(conv(y, w2), bn2)
    return jax.nn.relu(y + x)


if __name__ == "__main__":
    key = jax.random.PRNGKey(0)
    ks = jax.random.split(key, 12)

    x = jax.random.normal(ks[0], (N, C, H, W), jnp.float32)

    kaiming_std = (2.0 / (KH * KW * C)) ** 0.5
    w1 = jax.random.normal(ks[1], (C, C, KH, KW), jnp.float32) * kaiming_std
    w2 = jax.random.normal(ks[2], (C, C, KH, KW), jnp.float32) * kaiming_std

    bn1 = (jax.random.uniform(ks[3], (C,), jnp.float32, 0.5, 1.5),   # gamma
           jax.random.normal(ks[4], (C,), jnp.float32) * 0.1,        # beta
           jax.random.normal(ks[5], (C,), jnp.float32) * 0.1,        # running mean
           jax.random.uniform(ks[6], (C,), jnp.float32, 0.5, 1.5))   # running var
    bn2 = (jax.random.uniform(ks[7], (C,), jnp.float32, 0.5, 1.5),
           jax.random.normal(ks[8], (C,), jnp.float32) * 0.1,
           jax.random.normal(ks[9], (C,), jnp.float32) * 0.1,
           jax.random.uniform(ks[10], (C,), jnp.float32, 0.5, 1.5))

    # One-time parameter preprocessing (hoisted out of the per-forward path).
    block_params = jax.block_until_ready(prepare_block_params(w1, w2, bn1, bn2))

    out = resnet_basic_block(x, block_params)
    out = jax.block_until_ready(out)

    ref = reference_block(x, w1, w2, bn1, bn2)
    assert out.shape == (N, C, H, W) and out.dtype == jnp.float32
    assert jnp.allclose(out, ref, atol=1e-3, rtol=1e-3), "mismatch vs reference"

    print("KERNEL_OK")
</pallas_src>

<mosaic_0001>
module attributes {stable_mosaic.version = 11 : i64} {
  func.func @basic_block_kernel(%arg0: memref<16x128xf32, #tpu.memory_space<vmem>>, %arg1: memref<384x128xf32, #tpu.memory_space<vmem>>, %arg2: memref<384x128xf32, #tpu.memory_space<vmem>>, %arg3: memref<1x128xf32, #tpu.memory_space<vmem>>, %arg4: memref<1x128xf32, #tpu.memory_space<vmem>>, %arg5: memref<16x128xf32, #tpu.memory_space<vmem>>) attributes {dimension_semantics = [], scalar_prefetch = 0 : i64, scratch_operands = 0 : i64, tpu.core_type = #tpu.core_type<tc>} {
    %c0 = arith.constant 0 : index
    %c0_0 = arith.constant 0 : index
    %0 = vector.load %arg0[%c0, %c0_0] : memref<16x128xf32, #tpu.memory_space<vmem>>, vector<16x128xf32>
    %1 = tpu.iota {dimensions = array<i32: 0>} : vector<16x128xi32>
    %c0_i32 = arith.constant 0 : i32
    %2 = vector.broadcast %c0_i32 : i32 to vector<16x128xi32>
    %3 = arith.cmpi eq, %1, %2 : vector<16x128xi32>
    %c15_i32 = arith.constant 15 : i32
    %4 = vector.broadcast %c15_i32 : i32 to vector<16x128xi32>
    %5 = arith.cmpi eq, %1, %4 : vector<16x128xi32>
    %c1_i32 = arith.constant 1 : i32
    %6 = tpu.dynamic_rotate %0 by %c1_i32 dim 0 : vector<16x128xf32>, i32 -> vector<16x128xf32>
    %cst = arith.constant 0.000000e+00 : f32
    %7 = vector.broadcast %cst : f32 to vector<16x128xf32>
    %8 = arith.select %3, %7, %6 : vector<16x128xi1>, vector<16x128xf32>
    %c15_i32_1 = arith.constant 15 : i32
    %9 = tpu.dynamic_rotate %0 by %c15_i32_1 dim 0 : vector<16x128xf32>, i32 -> vector<16x128xf32>
    %cst_2 = arith.constant 0.000000e+00 : f32
    %10 = vector.broadcast %cst_2 : f32 to vector<16x128xf32>
    %11 = arith.select %5, %10, %9 : vector<16x128xi1>, vector<16x128xf32>
    %12 = tpu.concatenate %8, %0, %11 in 1 : vector<16x128xf32>, vector<16x128xf32>, vector<16x128xf32> -> vector<16x384xf32>
    %c0_3 = arith.constant 0 : index
    %c0_4 = arith.constant 0 : index
    %13 = vector.load %arg1[%c0_3, %c0_4] : memref<384x128xf32, #tpu.memory_space<vmem>>, vector<384x128xf32>
    %cst_5 = arith.constant dense<0.000000e+00> : vector<16x128xf32>
    %14 = tpu.matmul %12, %13, %cst_5 {dimension_numbers = #tpu.dot_dimension_numbers<[1], [0], [0], [1], [0, 0, 1, 1], [], []>} : vector<16x384xf32>, vector<384x128xf32>, vector<16x128xf32> -> vector<16x128xf32>
    %c0_6 = arith.constant 0 : index
    %c0_7 = arith.constant 0 : index
    %15 = vector.load %arg3[%c0_6, %c0_7] : memref<1x128xf32, #tpu.memory_space<vmem>>, vector<1x128xf32>
    %16 = vector.broadcast %15 : vector<1x128xf32> to vector<16x128xf32>
    %17 = arith.addf %14, %16 : vector<16x128xf32>
    %cst_8 = arith.constant 0.000000e+00 : f32
    %18 = vector.broadcast %cst_8 : f32 to vector<16x128xf32>
    %19 = arith.maximumf %17, %18 : vector<16x128xf32>
    %c1_i32_9 = arith.constant 1 : i32
    %20 = tpu.dynamic_rotate %19 by %c1_i32_9 dim 0 : vector<16x128xf32>, i32 -> vector<16x128xf32>
    %cst_10 = arith.constant 0.000000e+00 : f32
    %21 = vector.broadcast %cst_10 : f32 to vector<16x128xf32>
    %22 = arith.select %3, %21, %20 : vector<16x128xi1>, vector<16x128xf32>
    %c15_i32_11 = arith.constant 15 : i32
    %23 = tpu.dynamic_rotate %19 by %c15_i32_11 dim 0 : vector<16x128xf32>, i32 -> vector<16x128xf32>
    %cst_12 = arith.constant 0.000000e+00 : f32
    %24 = vector.broadcast %cst_12 : f32 to vector<16x128xf32>
    %25 = arith.select %5, %24, %23 : vector<16x128xi1>, vector<16x128xf32>
    %26 = tpu.concatenate %22, %19, %25 in 1 : vector<16x128xf32>, vector<16x128xf32>, vector<16x128xf32> -> vector<16x384xf32>
    %c0_13 = arith.constant 0 : index
    %c0_14 = arith.constant 0 : index
    %27 = vector.load %arg2[%c0_13, %c0_14] : memref<384x128xf32, #tpu.memory_space<vmem>>, vector<384x128xf32>
    %cst_15 = arith.constant dense<0.000000e+00> : vector<16x128xf32>
    %28 = tpu.matmul %26, %27, %cst_15 {dimension_numbers = #tpu.dot_dimension_numbers<[1], [0], [0], [1], [0, 0, 1, 1], [], []>} : vector<16x384xf32>, vector<384x128xf32>, vector<16x128xf32> -> vector<16x128xf32>
    %c0_16 = arith.constant 0 : index
    %c0_17 = arith.constant 0 : index
    %29 = vector.load %arg4[%c0_16, %c0_17] : memref<1x128xf32, #tpu.memory_space<vmem>>, vector<1x128xf32>
    %30 = vector.broadcast %29 : vector<1x128xf32> to vector<16x128xf32>
    %31 = arith.addf %28, %30 : vector<16x128xf32>
    %32 = arith.addf %31, %0 : vector<16x128xf32>
    %cst_18 = arith.constant 0.000000e+00 : f32
    %33 = vector.broadcast %cst_18 : f32 to vector<16x128xf32>
    %34 = arith.maximumf %32, %33 : vector<16x128xf32>
    %c0_19 = arith.constant 0 : index
    %c0_20 = arith.constant 0 : index
    %35 = vector.load %arg5[%c0_19, %c0_20] : memref<16x128xf32, #tpu.memory_space<vmem>>, vector<16x128xf32>
    tpu.vector_store %arg5[%c0_19, %c0_20], %34 {strides = array<i32>} : memref<16x128xf32, #tpu.memory_space<vmem>>, vector<16x128xf32>,
    return
  }
}

</mosaic_0001>

<llo_original>
// kernel: basic_block_slab.1
$region0: #{basic_block_slab.1}
  #allocation0 [shape = 'u32[]', space=smem, size = 0x4, offset = 0x4, fixed_abs, tag = 'smem constant byte address 0x4 - core index']
  #allocation1 [shape = 'u32[144,128]{1,0:T(1,128)}', space=vmem, size = 0x12000, scoped, tag = 'internal scratch']
  %s0 = inlined_call_operand.hbm [shape: f32[16,128], index: 0, kind: input, shape index: {}]
  %s1 = inlined_call_operand.hbm [shape: f32[384,128], index: 1, kind: input, shape index: {}]
  %s2 = inlined_call_operand.hbm [shape: f32[384,128], index: 2, kind: input, shape index: {}]
  %s3 = inlined_call_operand.vmem [shape: f32[1,128], index: 3, kind: input, shape index: {}]
  %s4 = inlined_call_operand.vmem [shape: f32[1,128], index: 4, kind: input, shape index: {}]
  %s5 = inlined_call_operand.hbm [shape: f32[16,128], index: 5, kind: output, shape index: {}]
  %s6 = sld [smem:[#allocation0]]
  $region42: #{basic_block_slab.1} parent=0
    _
  %s8 = ssub.s32 1, %s6
  %s9 = scalar_select 0, %s8, %s6
  $region1: #{basic_block_slab.1} parent=0
    #allocation2 [shape = 'u8[8192]{0}', space=vmem, size = 0x2000, scoped, tag = 'input window, operand 0, single buffered']
    #allocation3 [shape = 's32[1]{0}', space=sflag, size = 0x4, scoped, tag = 'scoped memory for basic_block_slab.1']
    #allocation4 [shape = 's32[1]{0}', space=sflag, size = 0x4, scoped, tag = 'scoped memory for basic_block_slab.1']
    #allocation5 [shape = 'u8[196608]{0}', space=vmem, size = 0x30000, scoped, tag = 'input window, operand 1, single buffered']
    #allocation6 [shape = 's32[1]{0}', space=sflag, size = 0x4, scoped, tag = 'scoped memory for basic_block_slab.1']
    #allocation7 [shape = 'u8[196608]{0}', space=vmem, size = 0x30000, scoped, tag = 'input window, operand 2, single buffered']
    #allocation8 [shape = 'u8[8192]{0}', space=vmem, size = 0x2000, scoped, tag = 'output window, operand 0, single buffered']
    %10 = vsyncpa [#allocation3], 0
    %11 = vsyncpa [#allocation6], 0
    %12 = vsyncpa [#allocation4], 0
    // Predicated region
    $region2: #{basic_block_slab.1} parent=1 // pred_check
      _
    $region3: #{basic_block_slab.1} parent=1 // pred_check_branch
      %14 = sbr.rel (0) target = $region5
    $region4: #{basic_block_slab.1} parent=1 // pred_region
      %s16 = ssub.s32 256, 256
      %17 = vsyncadd [#allocation3], %s16
      %s18 = sshll.u32 [#allocation2], 4
      %s19 = int_to_ptr.vmem [resolvable:$true] %s18
      %24 = dma.hbm_to_vmem [thread:$0]  %s0, 256, %s19, [#allocation3], 128, 128, 8
    $region5: #{basic_block_slab.1} parent=1 // pred_fallthru
      _
    // Predicated region
    $region6: #{basic_block_slab.1} parent=1 // pred_check
      _
    $region7: #{basic_block_slab.1} parent=1 // pred_check_branch
      %26 = sbr.rel (0) target = $region9
    $region8: #{basic_block_slab.1} parent=1 // pred_region
      %s28 = ssub.s32 6144, 6144
      %29 = vsyncadd [#allocation6], %s28
      %s30 = sshll.u32 [#allocation5], 4
      %s31 = int_to_ptr.vmem [resolvable:$true] %s30
      %36 = dma.hbm_to_vmem [thread:$0]  %s1, 6144, %s31, [#allocation6], 128, 128, 8
    $region9: #{basic_block_slab.1} parent=1 // pred_fallthru
      _
    // Predicated region
    $region10: #{basic_block_slab.1} parent=1 // pred_check
      _
    $region11: #{basic_block_slab.1} parent=1 // pred_check_branch
      %38 = sbr.rel (0) target = $region13
    $region12: #{basic_block_slab.1} parent=1 // pred_region
      %s40 = ssub.s32 6144, 6144
      %41 = vsyncadd [#allocation6], %s40
      %s42 = sshll.u32 [#allocation7], 4
      %s43 = int_to_ptr.vmem [resolvable:$true] %s42
      %48 = dma.hbm_to_vmem [thread:$0]  %s2, 6144, %s43, [#allocation6], 128, 128, 8
    $region13: #{basic_block_slab.1} parent=1 // pred_fallthru
      _
    // Predicated region
    $region14: #{basic_block_slab.1} parent=1 // pred_check
      _
    $region15: #{basic_block_slab.1} parent=1 // pred_check_branch
      %50 = sbr.rel (0) target = $region17
    $region16: #{basic_block_slab.1} parent=1 // pred_region
      _
    $region17: #{basic_block_slab.1} parent=1 // pred_fallthru
      _
    // Predicated region
    $region18: #{basic_block_slab.1} parent=1 // pred_check
      _
    $region19: #{basic_block_slab.1} parent=1 // pred_check_branch
      %52 = sbr.rel (0) target = $region21
    $region20: #{basic_block_slab.1} parent=1 // pred_region
      _
    $region21: #{basic_block_slab.1} parent=1 // pred_fallthru
      _
    // Predicated region
    $region22: #{basic_block_slab.1} parent=1 // pred_check
      _
    $region23: #{basic_block_slab.1} parent=1 // pred_check_branch
      %54 = sbr.rel (0) target = $region25
    $region24: #{basic_block_slab.1} parent=1 // pred_region
      %55 = dma.done [#allocation3], 256
    $region25: #{basic_block_slab.1} parent=1 // pred_fallthru
      _
    // Predicated region
    $region26: #{basic_block_slab.1} parent=1 // pred_check
      _
    $region27: #{basic_block_slab.1} parent=1 // pred_check_branch
      %57 = sbr.rel (0) target = $region29
    $region28: #{basic_block_slab.1} parent=1 // pred_region
      %58 = dma.done [#allocation6], 6144
    $region29: #{basic_block_slab.1} parent=1 // pred_fallthru
      _
    // Predicated region
    $region30: #{basic_block_slab.1} parent=1 // pred_check
      _
    $region31: #{basic_block_slab.1} parent=1 // pred_check_branch
      %60 = sbr.rel (0) target = $region33
    $region32: #{basic_block_slab.1} parent=1 // pred_region
      %61 = dma.done [#allocation6], 6144
    $region33: #{basic_block_slab.1} parent=1 // pred_fallthru
      _
    %v62 = vld [vmem:[#allocation2] sm:$0xff]
    %v63 = vld [vmem:[#allocation2 + $0x8] sm:$0xff]
    %v64 = vlaneseq
    %v65 = vshrl.u32 %v64, 7
    %v66 = vadd.s32 %v65, 8
    %vm67 = vcmp.eq.s32.totalorder %v65, 0
    %vm68 = vcmp.eq.s32.totalorder %v66, 0
    %vm69 = vcmp.eq.s32.totalorder %v65, 15
    %vm70 = vcmp.eq.s32.totalorder %v66, 15
    %v71 = vrot.slane %v62, 7
    %v72 = vrot.slane %v63, 7
    %vm73 = vcmp.lt.s32.totalorder %v65, 1
    %v74 = vsel %vm73, %v71, %v72
    %v75 = vsel %vm73, %v72, %v71
    %v76 = vsel %vm67, 0.0, %v75
    %v77 = vsel %vm68, 0.0, %v74
    %v78 = vrot.slane %v62, 1
    %v79 = vrot.slane %v63, 1
    %vm80 = vcmp.lt.s32.totalorder %v65, 7
    %v81 = vsel %vm80, %v78, %v79
    %v82 = vsel %vm80, %v79, %v78
    %v83 = vsel %vm69, 0.0, %v81
    %v84 = vsel %vm70, 0.0, %v82
    %v85 = vld [vmem:[#allocation5] sm:$0xff]
    %v86 = vld [vmem:[#allocation5 + $0x8] sm:$0xff]
    %v87 = vld [vmem:[#allocation5 + $0x10] sm:$0xff]
    %v88 = vld [vmem:[#allocation5 + $0x18] sm:$0xff]
    %v89 = vld [vmem:[#allocation5 + $0x20] sm:$0xff]
    %v90 = vld [vmem:[#allocation5 + $0x28] sm:$0xff]
    %v91 = vld [vmem:[#allocation5 + $0x30] sm:$0xff]
    %v92 = vld [vmem:[#allocation5 + $0x38] sm:$0xff]
    %v93 = vld [vmem:[#allocation5 + $0x40] sm:$0xff]
    %v94 = vld [vmem:[#allocation5 + $0x48] sm:$0xff]
    %v95 = vld [vmem:[#allocation5 + $0x50] sm:$0xff]
    %v96 = vld [vmem:[#allocation5 + $0x58] sm:$0xff]
    %v97 = vld [vmem:[#allocation5 + $0x60] sm:$0xff]
    %v98 = vld [vmem:[#allocation5 + $0x68] sm:$0xff]
    %v99 = vld [vmem:[#allocation5 + $0x70] sm:$0xff]
    %v100 = vld [vmem:[#allocation5 + $0x78] sm:$0xff]
    %v101 = vld [vmem:[#allocation5 + $0x80] sm:$0xff]
    %v102 = vld [vmem:[#allocation5 + $0x88] sm:$0xff]
    %v103 = vld [vmem:[#allocation5 + $0x90] sm:$0xff]
    %v104 = vld [vmem:[#allocation5 + $0x98] sm:$0xff]
    %v105 = vld [vmem:[#allocation5 + $0xa0] sm:$0xff]
    %v106 = vld [vmem:[#allocation5 + $0xa8] sm:$0xff]
    %v107 = vld [vmem:[#allocation5 + $0xb0] sm:$0xff]
    %v108 = vld [vmem:[#allocation5 + $0xb8] sm:$0xff]
    %v109 = vld [vmem:[#allocation5 + $0xc0] sm:$0xff]
    %v110 = vld [vmem:[#allocation5 + $0xc8] sm:$0xff]
    %v111 = vld [vmem:[#allocation5 + $0xd0] sm:$0xff]
    %v112 = vld [vmem:[#allocation5 + $0xd8] sm:$0xff]
    %v113 = vld [vmem:[#allocation5 + $0xe0] sm:$0xff]
    %v114 = vld [vmem:[#allocation5 + $0xe8] sm:$0xff]
    %v115 = vld [vmem:[#allocation5 + $0xf0] sm:$0xff]
    %v116 = vld [vmem:[#allocation5 + $0xf8] sm:$0xff]
    %v117 = vld [vmem:[#allocation5 + $0x100] sm:$0xff]
    %v118 = vld [vmem:[#allocation5 + $0x108] sm:$0xff]
    %v119 = vld [vmem:[#allocation5 + $0x110] sm:$0xff]
    %v120 = vld [vmem:[#allocation5 + $0x118] sm:$0xff]
    %v121 = vld [vmem:[#allocation5 + $0x120] sm:$0xff]
    %v122 = vld [vmem:[#allocation5 + $0x128] sm:$0xff]
    %v123 = vld [vmem:[#allocation5 + $0x130] sm:$0xff]
    %v124 = vld [vmem:[#allocation5 + $0x138] sm:$0xff]
    %v125 = vld [vmem:[#allocation5 + $0x140] sm:$0xff]
    %v126 = vld [vmem:[#allocation5 + $0x148] sm:$0xff]
    %v127 = vld [vmem:[#allocation5 + $0x150] sm:$0xff]
    %v128 = vld [vmem:[#allocation5 + $0x158] sm:$0xff]
    %v129 = vld [vmem:[#allocation5 + $0x160] sm:$0xff]
    %v130 = vld [vmem:[#allocation5 + $0x168] sm:$0xff]
    %v131 = vld [vmem:[#allocation5 + $0x170] sm:$0xff]
    %v132 = vld [vmem:[#allocation5 + $0x178] sm:$0xff]
    %v133 = vld [vmem:[%s3] sm:$0x1]
    %v135 = vlaneseq
    %v136 = vshrl.u32 %v135, 7
    %v137 = vsub.s32 0, %v136
    %v138 = vrot.slane %v133, %v137
    %140 = vmatprep.subr.mxu0 0.0
    %141 = vmatpush1.msra.mxu0 %v100
    %142 = vmatprep.subr.mxu0 0.0
    %143 = vmatpush1.msra.mxu0 %v99
    %144 = vmatprep.subr.mxu0 0.0
    %145 = vmatpush1.msra.mxu0 %v98
    %146 = vmatprep.subr.mxu0 0.0
    %147 = vmatpush1.msra.mxu0 %v97
    %148 = vmatprep.subr.mxu0 0.0
    %149 = vmatpush1.msra.mxu0 %v96
    %150 = vmatprep.subr.mxu0 0.0
    %151 = vmatpush1.msra.mxu0 %v95
    %152 = vmatprep.subr.mxu0 0.0
    %153 = vmatpush1.msra.mxu0 %v94
    %154 = vmatprep.subr.mxu0 0.0
    %155 = vmatpush1.msra.mxu0 %v93
    %156 = vmatprep.subr.mxu0 0.0
    %157 = vmatpush1.msra.mxu0 %v92
    %158 = vmatprep.subr.mxu0 0.0
    %159 = vmatpush1.msra.mxu0 %v91
    %160 = vmatprep.subr.mxu0 0.0
    %161 = vmatpush1.msra.mxu0 %v90
    %162 = vmatprep.subr.mxu0 0.0
    %163 = vmatpush1.msra.mxu0 %v89
    %164 = vmatprep.subr.mxu0 0.0
    %165 = vmatpush1.msra.mxu0 %v88
    %166 = vmatprep.subr.mxu0 0.0
    %167 = vmatpush1.msra.mxu0 %v87
    %168 = vmatprep.subr.mxu0 0.0
    %169 = vmatpush1.msra.mxu0 %v86
    %170 = vmatprep.subr.mxu0 0.0
    %171 = vmatpush1.msra.mxu0 %v85
    %172 = vmatprep.subr.mxu0 0.0
    %173 = vmatpush2.msra.mxu0 %v116
    %174 = vmatprep.subr.mxu0 0.0
    %175 = vmatpush2.msra.mxu0 %v115
    %176 = vmatprep.subr.mxu0 0.0
    %177 = vmatpush2.msra.mxu0 %v114
    %178 = vmatprep.subr.mxu0 0.0
    %179 = vmatpush2.msra.mxu0 %v113
    %180 = vmatprep.subr.mxu0 0.0
    %181 = vmatpush2.msra.mxu0 %v112
    %182 = vmatprep.subr.mxu0 0.0
    %183 = vmatpush2.msra.mxu0 %v111
    %184 = vmatprep.subr.mxu0 0.0
    %185 = vmatpush2.msra.mxu0 %v110
    %186 = vmatprep.subr.mxu0 0.0
    %187 = vmatpush2.msra.mxu0 %v109
    %188 = vmatprep.subr.mxu0 0.0
    %189 = vmatpush2.msra.mxu0 %v108
    %190 = vmatprep.subr.mxu0 0.0
    %191 = vmatpush2.msra.mxu0 %v107
    %192 = vmatprep.subr.mxu0 0.0
    %193 = vmatpush2.msra.mxu0 %v106
    %194 = vmatprep.subr.mxu0 0.0
    %195 = vmatpush2.msra.mxu0 %v105
    %196 = vmatprep.subr.mxu0 0.0
    %197 = vmatpush2.msra.mxu0 %v104
    %198 = vmatprep.subr.mxu0 0.0
    %199 = vmatpush2.msra.mxu0 %v103
    %200 = vmatprep.subr.mxu0 0.0
    %201 = vmatpush2.msra.mxu0 %v102
    %202 = vmatprep.subr.mxu0 0.0
    %203 = vmatpush2.msra.mxu0 %v101
    %204 = vmatprep.mubr.f32.mxu0 %v62
    %205 = vmatmul.mubr.f32.gmra.mxu0 %v76
    %v206 = vpop.f32.mrf.mxu0
    %v207 = vadd.f32 %v138, %v206
    %v208 = vpop.f32.mrf.mxu0
    %209 = vmatprep.mubr.f32.mxu0 %v63
    %210 = vmatmul.mubr.f32.gmra.mxu0 %v77
    %v211 = vpop.f32.mrf.mxu0
    %v212 = vadd.f32 %v138, %v211
    %v213 = vpop.f32.mrf.mxu0
    %214 = vdwg.mxu0
    %215 = vmatprep.subr.mxu0 0.0
    %216 = vmatpush1.msra.mxu0 %v132
    %217 = vmatprep.subr.mxu0 0.0
    %218 = vmatpush1.msra.mxu0 %v131
    %219 = vmatprep.subr.mxu0 0.0
    %220 = vmatpush1.msra.mxu0 %v130
    %221 = vmatprep.subr.mxu0 0.0
    %222 = vmatpush1.msra.mxu0 %v129
    %223 = vmatprep.subr.mxu0 0.0
    %224 = vmatpush1.msra.mxu0 %v128
    %225 = vmatprep.subr.mxu0 0.0
    %226 = vmatpush1.msra.mxu0 %v127
    %227 = vmatprep.subr.mxu0 0.0
    %228 = vmatpush1.msra.mxu0 %v126
    %229 = vmatprep.subr.mxu0 0.0
    %230 = vmatpush1.msra.mxu0 %v125
    %231 = vmatprep.subr.mxu0 0.0
    %232 = vmatpush1.msra.mxu0 %v124
    %233 = vmatprep.subr.mxu0 0.0
    %234 = vmatpush1.msra.mxu0 %v123
    %235 = vmatprep.subr.mxu0 0.0
    %236 = vmatpush1.msra.mxu0 %v122
    %237 = vmatprep.subr.mxu0 0.0
    %238 = vmatpush1.msra.mxu0 %v121
    %239 = vmatprep.subr.mxu0 0.0
    %240 = vmatpush1.msra.mxu0 %v120
    %241 = vmatprep.subr.mxu0 0.0
    %242 = vmatpush1.msra.mxu0 %v119
    %243 = vmatprep.subr.mxu0 0.0
    %244 = vmatpush1.msra.mxu0 %v118
    %245 = vmatprep.subr.mxu0 0.0
    %246 = vmatpush1.msra.mxu0 %v117
    %247 = vmatprep.subr.mxu0 0.0
    %248 = vmatpush2.msra.mxu0 0.0
    %249 = vmatprep.subr.mxu0 0.0
    %250 = vmatpush2.msra.mxu0 0.0
    %251 = vmatprep.subr.mxu0 0.0
    %252 = vmatpush2.msra.mxu0 0.0
    %253 = vmatprep.subr.mxu0 0.0
    %254 = vmatpush2.msra.mxu0 0.0
    %255 = vmatprep.subr.mxu0 0.0
    %256 = vmatpush2.msra.mxu0 0.0
    %257 = vmatprep.subr.mxu0 0.0
    %258 = vmatpush2.msra.mxu0 0.0
    %259 = vmatprep.subr.mxu0 0.0
    %260 = vmatpush2.msra.mxu0 0.0
    %261 = vmatprep.subr.mxu0 0.0
    %262 = vmatpush2.msra.mxu0 0.0
    %263 = vmatprep.subr.mxu0 0.0
    %264 = vmatpush2.msra.mxu0 0.0
    %265 = vmatprep.subr.mxu0 0.0
    %266 = vmatpush2.msra.mxu0 0.0
    %267 = vmatprep.subr.mxu0 0.0
    %268 = vmatpush2.msra.mxu0 0.0
    %269 = vmatprep.subr.mxu0 0.0
    %270 = vmatpush2.msra.mxu0 0.0
    %271 = vmatprep.subr.mxu0 0.0
    %272 = vmatpush2.msra.mxu0 0.0
    %273 = vmatprep.subr.mxu0 0.0
    %274 = vmatpush2.msra.mxu0 0.0
    %275 = vmatprep.subr.mxu0 0.0
    %276 = vmatpush2.msra.mxu0 0.0
    %277 = vmatprep.subr.mxu0 0.0
    %278 = vmatpush2.msra.mxu0 0.0
    %279 = vmatprep.mubr.f32.mxu0 0.0
    %280 = vmatmul.mubr.f32.gmra.mxu0 %v83
    %v281 = vpop.f32.mrf.mxu0
    %v282 = vadd.f32 %v207, %v281
    %v283 = vpop.f32.mrf.mxu0
    %284 = vmatprep.mubr.f32.mxu0 0.0
    %285 = vmatmul.mubr.f32.gmra.mxu0 %v84
    %v286 = vpop.f32.mrf.mxu0
    %v287 = vadd.f32 %v212, %v286
    %v288 = vpop.f32.mrf.mxu0
    %289 = vdwg.mxu0
    %v290 = vmax.f32 %v282, 0.0
    %v291 = vmax.f32 %v287, 0.0
    %v292 = vrot.slane %v290, 7
    %v293 = vrot.slane %v291, 7
    %v294 = vsel %vm73, %v292, %v293
    %v295 = vsel %vm73, %v293, %v292
    %v296 = vsel %vm67, 0.0, %v295
    %v297 = vsel %vm68, 0.0, %v294
    %v298 = vrot.slane %v290, 1
    %v299 = vrot.slane %v291, 1
    %v300 = vsel %vm80, %v298, %v299
    %v301 = vsel %vm80, %v299, %v298
    %v302 = vsel %vm69, 0.0, %v300
    %v303 = vsel %vm70, 0.0, %v301
    %v304 = vld [vmem:[#allocation7] sm:$0xff]
    %v305 = vld [vmem:[#allocation7 + $0x8] sm:$0xff]
    %v306 = vld [vmem:[#allocation7 + $0x10] sm:$0xff]
    %v307 = vld [vmem:[#allocation7 + $0x18] sm:$0xff]
    %v308 = vld [vmem:[#allocation7 + $0x20] sm:$0xff]
    %v309 = vld [vmem:[#allocation7 + $0x28] sm:$0xff]
    %v310 = vld [vmem:[#allocation7 + $0x30] sm:$0xff]
    %v311 = vld [vmem:[#allocation7 + $0x38] sm:$0xff]
    %v312 = vld [vmem:[#allocation7 + $0x40] sm:$0xff]
    %v313 = vld [vmem:[#allocation7 + $0x48] sm:$0xff]
    %v314 = vld [vmem:[#allocation7 + $0x50] sm:$0xff]
    %v315 = vld [vmem:[#allocation7 + $0x58] sm:$0xff]
    %v316 = vld [vmem:[#allocation7 + $0x60] sm:$0xff]
    %v317 = vld [vmem:[#allocation7 + $0x68] sm:$0xff]
    %v318 = vld [vmem:[#allocation7 + $0x70] sm:$0xff]
    %v319 = vld [vmem:[#allocation7 + $0x78] sm:$0xff]
    %v320 = vld [vmem:[#allocation7 + $0x80] sm:$0xff]
    %v321 = vld [vmem:[#allocation7 + $0x88] sm:$0xff]
    %v322 = vld [vmem:[#allocation7 + $0x90] sm:$0xff]
    %v323 = vld [vmem:[#allocation7 + $0x98] sm:$0xff]
    %v324 = vld [vmem:[#allocation7 + $0xa0] sm:$0xff]
    %v325 = vld [vmem:[#allocation7 + $0xa8] sm:$0xff]
    %v326 = vld [vmem:[#allocation7 + $0xb0] sm:$0xff]
    %v327 = vld [vmem:[#allocation7 + $0xb8] sm:$0xff]
    %v328 = vld [vmem:[#allocation7 + $0xc0] sm:$0xff]
    %v329 = vld [vmem:[#allocation7 + $0xc8] sm:$0xff]
    %v330 = vld [vmem:[#allocation7 + $0xd0] sm:$0xff]
    %v331 = vld [vmem:[#allocation7 + $0xd8] sm:$0xff]
    %v332 = vld [vmem:[#allocation7 + $0xe0] sm:$0xff]
    %v333 = vld [vmem:[#allocation7 + $0xe8] sm:$0xff]
    %v334 = vld [vmem:[#allocation7 + $0xf0] sm:$0xff]
    %v335 = vld [vmem:[#allocation7 + $0xf8] sm:$0xff]
    %v336 = vld [vmem:[#allocation7 + $0x100] sm:$0xff]
    %v337 = vld [vmem:[#allocation7 + $0x108] sm:$0xff]
    %v338 = vld [vmem:[#allocation7 + $0x110] sm:$0xff]
    %v339 = vld [vmem:[#allocation7 + $0x118] sm:$0xff]
    %v340 = vld [vmem:[#allocation7 + $0x120] sm:$0xff]
    %v341 = vld [vmem:[#allocation7 + $0x128] sm:$0xff]
    %v342 = vld [vmem:[#allocation7 + $0x130] sm:$0xff]
    %v343 = vld [vmem:[#allocation7 + $0x138] sm:$0xff]
    %v344 = vld [vmem:[#allocation7 + $0x140] sm:$0xff]
    %v345 = vld [vmem:[#allocation7 + $0x148] sm:$0xff]
    %v346 = vld [vmem:[#allocation7 + $0x150] sm:$0xff]
    %v347 = vld [vmem:[#allocation7 + $0x158] sm:$0xff]
    %v348 = vld [vmem:[#allocation7 + $0x160] sm:$0xff]
    %v349 = vld [vmem:[#allocation7 + $0x168] sm:$0xff]
    %v350 = vld [vmem:[#allocation7 + $0x170] sm:$0xff]
    %v351 = vld [vmem:[#allocation7 + $0x178] sm:$0xff]
    %v352 = vld [vmem:[%s4] sm:$0x1]
    %v354 = vlaneseq
    %v355 = vshrl.u32 %v354, 7
    %v356 = vsub.s32 0, %v355
    %v357 = vrot.slane %v352, %v356
    %359 = vmatprep.subr.mxu0 0.0
    %360 = vmatpush1.msra.mxu0 %v319
    %361 = vmatprep.subr.mxu0 0.0
    %362 = vmatpush1.msra.mxu0 %v318
    %363 = vmatprep.subr.mxu0 0.0
    %364 = vmatpush1.msra.mxu0 %v317
    %365 = vmatprep.subr.mxu0 0.0
    %366 = vmatpush1.msra.mxu0 %v316
    %367 = vmatprep.subr.mxu0 0.0
    %368 = vmatpush1.msra.mxu0 %v315
    %369 = vmatprep.subr.mxu0 0.0
    %370 = vmatpush1.msra.mxu0 %v314
    %371 = vmatprep.subr.mxu0 0.0
    %372 = vmatpush1.msra.mxu0 %v313
    %373 = vmatprep.subr.mxu0 0.0
    %374 = vmatpush1.msra.mxu0 %v312
    %375 = vmatprep.subr.mxu0 0.0
    %376 = vmatpush1.msra.mxu0 %v311
    %377 = vmatprep.subr.mxu0 0.0
    %378 = vmatpush1.msra.mxu0 %v310
    %379 = vmatprep.subr.mxu0 0.0
    %380 = vmatpush1.msra.mxu0 %v309
    %381 = vmatprep.subr.mxu0 0.0
    %382 = vmatpush1.msra.mxu0 %v308
    %383 = vmatprep.subr.mxu0 0.0
    %384 = vmatpush1.msra.mxu0 %v307
    %385 = vmatprep.subr.mxu0 0.0
    %386 = vmatpush1.msra.mxu0 %v306
    %387 = vmatprep.subr.mxu0 0.0
    %388 = vmatpush1.msra.mxu0 %v305
    %389 = vmatprep.subr.mxu0 0.0
    %390 = vmatpush1.msra.mxu0 %v304
    %391 = vmatprep.subr.mxu0 0.0
    %392 = vmatpush2.msra.mxu0 %v335
    %393 = vmatprep.subr.mxu0 0.0
    %394 = vmatpush2.msra.mxu0 %v334
    %395 = vmatprep.subr.mxu0 0.0
    %396 = vmatpush2.msra.mxu0 %v333
    %397 = vmatprep.subr.mxu0 0.0
    %398 = vmatpush2.msra.mxu0 %v332
    %399 = vmatprep.subr.mxu0 0.0
    %400 = vmatpush2.msra.mxu0 %v331
    %401 = vmatprep.subr.mxu0 0.0
    %402 = vmatpush2.msra.mxu0 %v330
    %403 = vmatprep.subr.mxu0 0.0
    %404 = vmatpush2.msra.mxu0 %v329
    %405 = vmatprep.subr.mxu0 0.0
    %406 = vmatpush2.msra.mxu0 %v328
    %407 = vmatprep.subr.mxu0 0.0
    %408 = vmatpush2.msra.mxu0 %v327
    %409 = vmatprep.subr.mxu0 0.0
    %410 = vmatpush2.msra.mxu0 %v326
    %411 = vmatprep.subr.mxu0 0.0
    %412 = vmatpush2.msra.mxu0 %v325
    %413 = vmatprep.subr.mxu0 0.0
    %414 = vmatpush2.msra.mxu0 %v324
    %415 = vmatprep.subr.mxu0 0.0
    %416 = vmatpush2.msra.mxu0 %v323
    %417 = vmatprep.subr.mxu0 0.0
    %418 = vmatpush2.msra.mxu0 %v322
    %419 = vmatprep.subr.mxu0 0.0
    %420 = vmatpush2.msra.mxu0 %v321
    %421 = vmatprep.subr.mxu0 0.0
    %422 = vmatpush2.msra.mxu0 %v320
    %423 = vmatprep.mubr.f32.mxu0 %v290
    %424 = vmatmul.mubr.f32.gmra.mxu0 %v296
    %v425 = vpop.f32.mrf.mxu0
    %v426 = vadd.f32 %v357, %v425
    %v427 = vpop.f32.mrf.mxu0
    %428 = vmatprep.mubr.f32.mxu0 %v291
    %429 = vmatmul.mubr.f32.gmra.mxu0 %v297
    %v430 = vpop.f32.mrf.mxu0
    %v431 = vadd.f32 %v357, %v430
    %v432 = vpop.f32.mrf.mxu0
    %433 = vdwg.mxu0
    %434 = vmatprep.subr.mxu0 0.0
    %435 = vmatpush1.msra.mxu0 %v351
    %436 = vmatprep.subr.mxu0 0.0
    %437 = vmatpush1.msra.mxu0 %v350
    %438 = vmatprep.subr.mxu0 0.0
    %439 = vmatpush1.msra.mxu0 %v349
    %440 = vmatprep.subr.mxu0 0.0
    %441 = vmatpush1.msra.mxu0 %v348
    %442 = vmatprep.subr.mxu0 0.0
    %443 = vmatpush1.msra.mxu0 %v347
    %444 = vmatprep.subr.mxu0 0.0
    %445 = vmatpush1.msra.mxu0 %v346
    %446 = vmatprep.subr.mxu0 0.0
    %447 = vmatpush1.msra.mxu0 %v345
    %448 = vmatprep.subr.mxu0 0.0
    %449 = vmatpush1.msra.mxu0 %v344
    %450 = vmatprep.subr.mxu0 0.0
    %451 = vmatpush1.msra.mxu0 %v343
    %452 = vmatprep.subr.mxu0 0.0
    %453 = vmatpush1.msra.mxu0 %v342
    %454 = vmatprep.subr.mxu0 0.0
    %455 = vmatpush1.msra.mxu0 %v341
    %456 = vmatprep.subr.mxu0 0.0
    %457 = vmatpush1.msra.mxu0 %v340
    %458 = vmatprep.subr.mxu0 0.0
    %459 = vmatpush1.msra.mxu0 %v339
    %460 = vmatprep.subr.mxu0 0.0
    %461 = vmatpush1.msra.mxu0 %v338
    %462 = vmatprep.subr.mxu0 0.0
    %463 = vmatpush1.msra.mxu0 %v337
    %464 = vmatprep.subr.mxu0 0.0
    %465 = vmatpush1.msra.mxu0 %v336
    %466 = vmatprep.subr.mxu0 0.0
    %467 = vmatpush2.msra.mxu0 0.0
    %468 = vmatprep.subr.mxu0 0.0
    %469 = vmatpush2.msra.mxu0 0.0
    %470 = vmatprep.subr.mxu0 0.0
    %471 = vmatpush2.msra.mxu0 0.0
    %472 = vmatprep.subr.mxu0 0.0
    %473 = vmatpush2.msra.mxu0 0.0
    %474 = vmatprep.subr.mxu0 0.0
    %475 = vmatpush2.msra.mxu0 0.0
    %476 = vmatprep.subr.mxu0 0.0
    %477 = vmatpush2.msra.mxu0 0.0
    %478 = vmatprep.subr.mxu0 0.0
    %479 = vmatpush2.msra.mxu0 0.0
    %480 = vmatprep.subr.mxu0 0.0
    %481 = vmatpush2.msra.mxu0 0.0
    %482 = vmatprep.subr.mxu0 0.0
    %483 = vmatpush2.msra.mxu0 0.0
    %484 = vmatprep.subr.mxu0 0.0
    %485 = vmatpush2.msra.mxu0 0.0
    %486 = vmatprep.subr.mxu0 0.0
    %487 = vmatpush2.msra.mxu0 0.0
    %488 = vmatprep.subr.mxu0 0.0
    %489 = vmatpush2.msra.mxu0 0.0
    %490 = vmatprep.subr.mxu0 0.0
    %491 = vmatpush2.msra.mxu0 0.0
    %492 = vmatprep.subr.mxu0 0.0
    %493 = vmatpush2.msra.mxu0 0.0
    %494 = vmatprep.subr.mxu0 0.0
    %495 = vmatpush2.msra.mxu0 0.0
    %496 = vmatprep.subr.mxu0 0.0
    %497 = vmatpush2.msra.mxu0 0.0
    %498 = vmatprep.mubr.f32.mxu0 0.0
    %499 = vmatmul.mubr.f32.gmra.mxu0 %v302
    %v500 = vpop.f32.mrf.mxu0
    %v501 = vadd.f32 %v426, %v500
    %v502 = vpop.f32.mrf.mxu0
    %503 = vmatprep.mubr.f32.mxu0 0.0
    %504 = vmatmul.mubr.f32.gmra.mxu0 %v303
    %v505 = vpop.f32.mrf.mxu0
    %v506 = vadd.f32 %v431, %v505
    %v507 = vpop.f32.mrf.mxu0
    %508 = vdwg.mxu0
    %v509 = vadd.f32 %v501, %v62
    %v510 = vadd.f32 %v506, %v63
    %v511 = vmax.f32 %v509, 0.0
    %v512 = vmax.f32 %v510, 0.0
    %513 = vst [vmem:[#allocation8] sm:$0xff] %v511
    %514 = vst [vmem:[#allocation8 + $0x8] sm:$0xff] %v512
    // Predicated region
    $region34: #{basic_block_slab.1} parent=1 // pred_check
      _
    $region35: #{basic_block_slab.1} parent=1 // pred_check_branch
      %516 = sbr.rel (0) target = $region37
    $region36: #{basic_block_slab.1} parent=1 // pred_region
      %s518 = ssub.s32 256, 256
      %519 = vsyncadd [#allocation4], %s518
      %s520 = sshll.u32 [#allocation8], 4
      %s521 = int_to_ptr.vmem [resolvable:$true] %s520
      %526 = dma.vmem_to_hbm [thread:$0]  %s521, 256, %s5, [#allocation4], 128, 128, 8
    $region37: #{basic_block_slab.1} parent=1 // pred_fallthru
      _
    // Predicated region
    $region38: #{basic_block_slab.1} parent=1 // pred_check
      _
    $region39: #{basic_block_slab.1} parent=1 // pred_check_branch
      %528 = sbr.rel (0) target = $region41
    $region40: #{basic_block_slab.1} parent=1 // pred_region
      %529 = dma.done [#allocation4], 256
    $region41: #{basic_block_slab.1} parent=1 // pred_fallthru
      _
    %530 = vsyncpa [#allocation3], 1
    %531 = vsyncpa [#allocation6], 1
    %532 = vsyncpa [#allocation4], 1

</llo_original>
